<compile_context>
chip_gen: v6e
topology: v6e:2x2x1
jax: 0.10.0
libtpu: 0.0.40
codegen_flags: <defaults>
</compile_context>

<pallas_src>
import jax
import jax.numpy as jnp
from jax.experimental import pallas as pl
from jax.experimental.pallas import tpu as pltpu

BN_EPS = 1e-5


def _round_up(x, m):
    return ((x + m - 1) // m) * m


def conv_bn_relu(x, weight, bias, gamma, beta, stride=(2, 2)):
    """Forward pass of ConvBnRelu.

    x:      (N, Cin, H, W)       float32, NCHW (PyTorch layout)
    weight: (Cout, Cin, KH, KW)  OIHW
    bias:   (Cout,)  -- accepted but unused: training-mode BN mean-subtraction cancels it exactly.
    gamma, beta: (Cout,) BatchNorm affine parameters.
    """
    del bias  # exactly cancelled by the BN batch-mean subtraction (output-preserving)

    N, Cin, H, W = x.shape
    Cout, Cin_w, KH, KW = weight.shape
    assert Cin == Cin_w
    sh, sw = stride
    ph, pw = KH // 2, KW // 2
    Hout = (H + 2 * ph - KH) // sh + 1
    Wout = (W + 2 * pw - KW) // sw + 1

    # Output-channel lane padding: 128 granule (256 when Cout > 128, for the v6e/v7x 2x256 MXU).
    granule = 128 if Cout <= 128 else 256
    Coutp = _round_up(Cout, granule)

    Kdim = KH * KW * Cin              # folded contraction depth
    M = Hout * Wout                   # GEMM rows per image
    TM = min(512, _round_up(M, 8))    # M tile: keeps per-step VMEM small on every chip generation
    Mp = _round_up(M, TM)
    n_mt = Mp // TM

    # ---- wrapper-side layout prep (lane-dense packing of the contraction dim) -------------
    # lhs[n, oh*Wout+ow, (kh*KW+kw)*Cin+ci] = x_pad[n, sh*oh+kh, sw*ow+kw, ci]
    x_nhwc = jnp.transpose(x, (0, 2, 3, 1))
    x_pad = jnp.pad(x_nhwc, ((0, 0), (ph, ph), (pw, pw), (0, 0))).astype(jnp.bfloat16)
    patches = [
        x_pad[:, kh:kh + sh * (Hout - 1) + 1:sh, kw:kw + sw * (Wout - 1) + 1:sw, :]
        for kh in range(KH) for kw in range(KW)
    ]
    lhs = jnp.concatenate(patches, axis=-1).reshape(N, M, Kdim)
    if Mp != M:  # zero rows: contribute exactly 0 to the BN sums, sliced off at the end
        lhs = jnp.pad(lhs, ((0, 0), (0, Mp - M), (0, 0)))

    # weights: (Cout, Cin, KH, KW) -> (KH*KW*Cin, Coutp), K ordering matching lhs, bf16, padded lanes
    w_r = jnp.transpose(weight, (2, 3, 1, 0)).reshape(Kdim, Cout)
    w_r = jnp.pad(w_r, ((0, 0), (0, Coutp - Cout))).astype(jnp.bfloat16)

    # ---- pass 1: one MXU GEMM per (image, M-tile) + per-tile BN partial stats --------------
    def conv_kernel(lhs_ref, w_ref, y_ref, stats_ref):
        y = jnp.dot(lhs_ref[0], w_ref[...],
                    preferred_element_type=jnp.float32)          # (TM, Coutp) f32
        y_ref[0] = y
        # BN partials straight from the in-register result (no re-read of the output block).
        stats_ref[0, 0:1, :] = jnp.sum(y, axis=0, keepdims=True)
        stats_ref[0, 1:2, :] = jnp.sum(y * y, axis=0, keepdims=True)

    y, stats = pl.pallas_call(
        conv_kernel,
        out_shape=(
            jax.ShapeDtypeStruct((N, Mp, Coutp), jnp.float32),
            jax.ShapeDtypeStruct((N * n_mt, 2, Coutp), jnp.float32),
        ),
        grid=(N, n_mt),
        in_specs=[
            pl.BlockSpec((1, TM, Kdim), lambda n, mt: (n, mt, 0)),
            pl.BlockSpec((Kdim, Coutp), lambda n, mt: (0, 0)),   # constant block -> fetched once
        ],
        out_specs=(
            pl.BlockSpec((1, TM, Coutp), lambda n, mt: (n, mt, 0)),
            pl.BlockSpec((1, 2, Coutp), lambda n, mt: (n * n_mt + mt, 0, 0)),
        ),
        compiler_params=pltpu.CompilerParams(
            dimension_semantics=("parallel", "parallel"),
            vmem_limit_bytes=32 * 1024 * 1024,
        ),
    )(lhs, w_r)

    # ---- tiny global BN statistics reduction (per-channel, training-mode) ------------------
    m_total = N * M                       # padded rows are exact zeros -> no contribution
    ch_sum = jnp.sum(stats[:, 0, :], axis=0)
    ch_sq = jnp.sum(stats[:, 1, :], axis=0)
    mean = ch_sum / m_total
    # E[y^2] - E[y]^2 with a >=0 guard (biased variance, as PyTorch training-mode BN normalizes).
    var = jnp.maximum(ch_sq / m_total - mean * mean, 0.0)
    gamma_p = jnp.pad(gamma.astype(jnp.float32), (0, Coutp - Cout))
    beta_p = jnp.pad(beta.astype(jnp.float32), (0, Coutp - Cout))
    inv_std = jax.lax.rsqrt(var + BN_EPS)
    scale = (gamma_p * inv_std).reshape(1, Coutp)
    shift = (beta_p - mean * gamma_p * inv_std).reshape(1, Coutp)

    # ---- pass 2: normalize + affine + ReLU, writing the UNPADDED NHWC-flat result ----------
    def bn_relu_kernel(y_ref, scale_ref, shift_ref, o_ref):
        z = jnp.maximum(y_ref[0] * scale_ref[...] + shift_ref[...], 0.0)   # (TM, Coutp)
        o_ref[0] = z[:, :Cout]                                             # drop lane padding here

    out_flat = pl.pallas_call(
        bn_relu_kernel,
        out_shape=jax.ShapeDtypeStruct((N, Mp, Cout), jnp.float32),
        grid=(N, n_mt),
        in_specs=[
            pl.BlockSpec((1, TM, Coutp), lambda n, mt: (n, mt, 0)),
            pl.BlockSpec((1, Coutp), lambda n, mt: (0, 0)),
            pl.BlockSpec((1, Coutp), lambda n, mt: (0, 0)),
        ],
        out_specs=pl.BlockSpec((1, TM, Cout), lambda n, mt: (n, mt, 0)),
        compiler_params=pltpu.CompilerParams(
            dimension_semantics=("parallel", "parallel"),
            vmem_limit_bytes=32 * 1024 * 1024,
        ),
    )(y, scale, shift)

    # NHWC-flat -> NCHW: single cheap XLA reshape+transpose, no padded-channel slice pass left.
    out_nhwc = out_flat[:, :M, :].reshape(N, Hout, Wout, Cout)
    return jnp.transpose(out_nhwc, (0, 3, 1, 2))


def _reference(x, weight, bias, gamma, beta, stride=(2, 2)):
    """Pure-JAX reference mirroring PyTorch Conv2d + training-mode BatchNorm2d + ReLU."""
    KH, KW = weight.shape[2], weight.shape[3]
    ph, pw = KH // 2, KW // 2
    y = jax.lax.conv_general_dilated(
        x, weight, window_strides=stride, padding=((ph, ph), (pw, pw)),
        dimension_numbers=("NCHW", "OIHW", "NCHW"),
    ) + bias.reshape(1, -1, 1, 1)
    mean = y.mean(axis=(0, 2, 3), keepdims=True)
    var = jnp.square(y - mean).mean(axis=(0, 2, 3), keepdims=True)
    y_hat = (y - mean) / jnp.sqrt(var + BN_EPS)
    out = y_hat * gamma.reshape(1, -1, 1, 1) + beta.reshape(1, -1, 1, 1)
    return jnp.maximum(out, 0.0)


if __name__ == "__main__":
    key = jax.random.PRNGKey(0)
    k_x, k_w, k_b, k_g, k_be = jax.random.split(key, 5)

    # Small shapes consistent with the module: ConvBnRelu(4, 8, (3, 3), stride=2)
    N, Cin, H, W = 2, 4, 16, 16
    Cout, KH, KW = 8, 3, 3

    x = jax.random.normal(k_x, (N, Cin, H, W), dtype=jnp.float32)
    weight = jax.random.normal(k_w, (Cout, Cin, KH, KW), dtype=jnp.float32) * 0.1
    bias = jax.random.normal(k_b, (Cout,), dtype=jnp.float32) * 0.1
    gamma = 1.0 + 0.1 * jax.random.normal(k_g, (Cout,), dtype=jnp.float32)
    beta = 0.1 * jax.random.normal(k_be, (Cout,), dtype=jnp.float32)

    fn = jax.jit(conv_bn_relu, static_argnames="stride")
    out = jax.block_until_ready(fn(x, weight, bias, gamma, beta, stride=(2, 2)))
    assert out.shape == (N, Cout, H // 2, W // 2), out.shape

    _bf16 = lambda a: a.astype(jnp.bfloat16).astype(jnp.float32)
    # Tight check vs. a reference fed the same bf16-rounded operands the MXU consumes.
    ref_mxu = _reference(_bf16(x), _bf16(weight), bias, gamma, beta, stride=(2, 2))
    err_mxu = float(jnp.max(jnp.abs(out - ref_mxu)))
    assert err_mxu < 2e-3, err_mxu
    # Sanity check vs. the full-f32 PyTorch-semantics reference (looser tol due to bf16 MXU inputs).
    ref_f32 = _reference(x, weight, bias, gamma, beta, stride=(2, 2))
    err_f32 = float(jnp.max(jnp.abs(out - ref_f32)))
    assert err_f32 < 5e-2, err_f32

    print("KERNEL_OK")
</pallas_src>

<mosaic_0001>
module attributes {stable_mosaic.version = 11 : i64} {
  func.func @conv_kernel(%arg0: i32, %arg1: i32, %arg2: memref<1x64x36xbf16, #tpu.memory_space<vmem>>, %arg3: memref<36x128xbf16, #tpu.memory_space<vmem>>, %arg4: memref<1x64x128xf32, #tpu.memory_space<vmem>>, %arg5: memref<1x2x128xf32, #tpu.memory_space<vmem>>) attributes {dimension_semantics = [#tpu.dimension_semantics<parallel>, #tpu.dimension_semantics<parallel>], iteration_bounds = array<i64: 2, 1>, scalar_prefetch = 0 : i64, scratch_operands = 0 : i64, tpu.core_type = #tpu.core_type<tc>, window_params = [{transform_indices = @transform_0, window_bounds = array<i64: 1, 64, 36>}, {pipeline_mode = #tpu.pipeline_mode<synchronous>, transform_indices = @transform_1, window_bounds = array<i64: 36, 128>}, {transform_indices = @transform_2, window_bounds = array<i64: 1, 64, 128>}, {transform_indices = @transform_3, window_bounds = array<i64: 1, 2, 128>}]} {
    %c0 = arith.constant 0 : index
    %c0_0 = arith.constant 0 : index
    %c0_1 = arith.constant 0 : index
    %0 = vector.load %arg2[%c0, %c0_0, %c0_1] : memref<1x64x36xbf16, #tpu.memory_space<vmem>>, vector<1x64x36xbf16>
    %1 = vector.shape_cast %0 : vector<1x64x36xbf16> to vector<64x36xbf16>
    %c0_2 = arith.constant 0 : index
    %c0_3 = arith.constant 0 : index
    %2 = vector.load %arg3[%c0_2, %c0_3] : memref<36x128xbf16, #tpu.memory_space<vmem>>, vector<36x128xbf16>
    %cst = arith.constant dense<0.000000e+00> : vector<64x128xf32>
    %3 = tpu.matmul %1, %2, %cst {dimension_numbers = #tpu.dot_dimension_numbers<[1], [0], [0], [1], [0, 0, 1, 1], [], []>} : vector<64x36xbf16>, vector<36x128xbf16>, vector<64x128xf32> -> vector<64x128xf32>
    %c0_4 = arith.constant 0 : index
    %c0_5 = arith.constant 0 : index
    %c0_6 = arith.constant 0 : index
    %4 = vector.load %arg4[%c0_4, %c0_5, %c0_6] : memref<1x64x128xf32, #tpu.memory_space<vmem>>, vector<1x64x128xf32>
    %5 = vector.shape_cast %4 : vector<1x64x128xf32> to vector<64x128xf32>
    %6 = vector.shape_cast %3 : vector<64x128xf32> to vector<1x64x128xf32>
    tpu.vector_store %arg4[%c0_4, %c0_5, %c0_6], %6 {strides = array<i32>} : memref<1x64x128xf32, #tpu.memory_space<vmem>>, vector<1x64x128xf32>,
    %cst_7 = arith.constant dense<0.000000e+00> : vector<128xf32>
    %7 = vector.multi_reduction <add>, %3, %cst_7 [0] : vector<64x128xf32> to vector<128xf32>
    %8 = vector.shape_cast %7 : vector<128xf32> to vector<1x128xf32>
    %c0_8 = arith.constant 0 : index
    %c0_9 = arith.constant 0 : index
    %c0_10 = arith.constant 0 : index
    %9 = vector.load %arg5[%c0_8, %c0_9, %c0_10] : memref<1x2x128xf32, #tpu.memory_space<vmem>>, vector<1x1x128xf32>
    %10 = vector.shape_cast %9 : vector<1x1x128xf32> to vector<1x128xf32>
    %11 = vector.shape_cast %8 : vector<1x128xf32> to vector<1x1x128xf32>
    tpu.vector_store %arg5[%c0_8, %c0_9, %c0_10], %11 {strides = array<i32>} : memref<1x2x128xf32, #tpu.memory_space<vmem>>, vector<1x1x128xf32>,
    %12 = arith.mulf %3, %3 : vector<64x128xf32>
    %cst_11 = arith.constant dense<0.000000e+00> : vector<128xf32>
    %13 = vector.multi_reduction <add>, %12, %cst_11 [0] : vector<64x128xf32> to vector<128xf32>
    %14 = vector.shape_cast %13 : vector<128xf32> to vector<1x128xf32>
    %c0_12 = arith.constant 0 : index
    %c1 = arith.constant 1 : index
    %c0_13 = arith.constant 0 : index
    %15 = vector.load %arg5[%c0_12, %c1, %c0_13] : memref<1x2x128xf32, #tpu.memory_space<vmem>>, vector<1x1x128xf32>
    %16 = vector.shape_cast %15 : vector<1x1x128xf32> to vector<1x128xf32>
    %17 = vector.shape_cast %14 : vector<1x128xf32> to vector<1x1x128xf32>
    tpu.vector_store %arg5[%c0_12, %c1, %c0_13], %17 {strides = array<i32>} : memref<1x2x128xf32, #tpu.memory_space<vmem>>, vector<1x1x128xf32>,
    return
  }
  func.func @transform_0(%arg0: i32, %arg1: i32) -> (i32, i32, i32) {
    %c0_i32 = arith.constant 0 : i32
    %c0_i32_0 = arith.constant 0 : i32
    return %arg0, %arg1, %c0_i32 : i32, i32, i32
  }
  func.func @transform_1(%arg0: i32, %arg1: i32) -> (i32, i32) {
    %c0_i32 = arith.constant 0 : i32
    %c0_i32_0 = arith.constant 0 : i32
    %c0_i32_1 = arith.constant 0 : i32
    return %c0_i32, %c0_i32_0 : i32, i32
  }
  func.func @transform_2(%arg0: i32, %arg1: i32) -> (i32, i32, i32) {
    %c0_i32 = arith.constant 0 : i32
    %c0_i32_0 = arith.constant 0 : i32
    return %arg0, %arg1, %c0_i32 : i32, i32, i32
  }
  func.func @transform_3(%arg0: i32, %arg1: i32) -> (i32, i32, i32) {
    %c1_i32 = arith.constant 1 : i32
    %0 = arith.muli %arg0, %c1_i32 : i32
    %1 = arith.addi %0, %arg1 : i32
    %c0_i32 = arith.constant 0 : i32
    %c0_i32_0 = arith.constant 0 : i32
    %c0_i32_1 = arith.constant 0 : i32
    return %1, %c0_i32, %c0_i32_0 : i32, i32, i32
  }
}

module attributes {stable_mosaic.version = 11 : i64} {
  func.func @bn_relu_kernel(%arg0: i32, %arg1: i32, %arg2: memref<1x64x128xf32, #tpu.memory_space<vmem>>, %arg3: memref<1x128xf32, #tpu.memory_space<vmem>>, %arg4: memref<1x128xf32, #tpu.memory_space<vmem>>, %arg5: memref<1x64x8xf32, #tpu.memory_space<vmem>>) attributes {dimension_semantics = [#tpu.dimension_semantics<parallel>, #tpu.dimension_semantics<parallel>], iteration_bounds = array<i64: 2, 1>, scalar_prefetch = 0 : i64, scratch_operands = 0 : i64, tpu.core_type = #tpu.core_type<tc>, window_params = [{transform_indices = @transform_0, window_bounds = array<i64: 1, 64, 128>}, {pipeline_mode = #tpu.pipeline_mode<synchronous>, transform_indices = @transform_1, window_bounds = array<i64: 1, 128>}, {pipeline_mode = #tpu.pipeline_mode<synchronous>, transform_indices = @transform_2, window_bounds = array<i64: 1, 128>}, {transform_indices = @transform_3, window_bounds = array<i64: 1, 64, 8>}]} {
    %c0 = arith.constant 0 : index
    %c0_0 = arith.constant 0 : index
    %c0_1 = arith.constant 0 : index
    %0 = vector.load %arg2[%c0, %c0_0, %c0_1] : memref<1x64x128xf32, #tpu.memory_space<vmem>>, vector<1x64x128xf32>
    %1 = vector.shape_cast %0 : vector<1x64x128xf32> to vector<64x128xf32>
    %c0_2 = arith.constant 0 : index
    %c0_3 = arith.constant 0 : index
    %2 = vector.load %arg3[%c0_2, %c0_3] : memref<1x128xf32, #tpu.memory_space<vmem>>, vector<1x128xf32>
    %3 = vector.broadcast %2 : vector<1x128xf32> to vector<64x128xf32>
    %4 = arith.mulf %1, %3 : vector<64x128xf32>
    %c0_4 = arith.constant 0 : index
    %c0_5 = arith.constant 0 : index
    %5 = vector.load %arg4[%c0_4, %c0_5] : memref<1x128xf32, #tpu.memory_space<vmem>>, vector<1x128xf32>
    %6 = vector.broadcast %5 : vector<1x128xf32> to vector<64x128xf32>
    %7 = arith.addf %4, %6 : vector<64x128xf32>
    %cst = arith.constant 0.000000e+00 : f32
    %8 = vector.broadcast %cst : f32 to vector<64x128xf32>
    %9 = arith.maximumf %7, %8 : vector<64x128xf32>
    %10 = vector.extract_strided_slice %9 {offsets = [0, 0], sizes = [64, 8], strides = [1, 1]} : vector<64x128xf32> to vector<64x8xf32>
    %c0_6 = arith.constant 0 : index
    %c0_7 = arith.constant 0 : index
    %c0_8 = arith.constant 0 : index
    %11 = vector.load %arg5[%c0_6, %c0_7, %c0_8] : memref<1x64x8xf32, #tpu.memory_space<vmem>>, vector<1x64x8xf32>
    %12 = vector.shape_cast %11 : vector<1x64x8xf32> to vector<64x8xf32>
    %13 = vector.shape_cast %10 : vector<64x8xf32> to vector<1x64x8xf32>
    tpu.vector_store %arg5[%c0_6, %c0_7, %c0_8], %13 {strides = array<i32>} : memref<1x64x8xf32, #tpu.memory_space<vmem>>, vector<1x64x8xf32>,
    return
  }
  func.func @transform_0(%arg0: i32, %arg1: i32) -> (i32, i32, i32) {
    %c0_i32 = arith.constant 0 : i32
    %c0_i32_0 = arith.constant 0 : i32
    return %arg0, %arg1, %c0_i32 : i32, i32, i32
  }
  func.func @transform_1(%arg0: i32, %arg1: i32) -> (i32, i32) {
    %c0_i32 = arith.constant 0 : i32
    %c0_i32_0 = arith.constant 0 : i32
    %c0_i32_1 = arith.constant 0 : i32
    return %c0_i32, %c0_i32_0 : i32, i32
  }
  func.func @transform_2(%arg0: i32, %arg1: i32) -> (i32, i32) {
    %c0_i32 = arith.constant 0 : i32
    %c0_i32_0 = arith.constant 0 : i32
    %c0_i32_1 = arith.constant 0 : i32
    return %c0_i32, %c0_i32_0 : i32, i32
  }
  func.func @transform_3(%arg0: i32, %arg1: i32) -> (i32, i32, i32) {
    %c0_i32 = arith.constant 0 : i32
    %c0_i32_0 = arith.constant 0 : i32
    return %arg0, %arg1, %c0_i32 : i32, i32, i32
  }
}

</mosaic_0001>

<llo_original>
// kernel: conv_bn_relu.3
$region0: #{conv_bn_relu.3}
  #allocation0 [shape = 'u32[]', space=smem, size = 0x4, offset = 0x4, fixed_abs, tag = 'smem constant byte address 0x4 - core index']
  #allocation1 [shape = 'u32[144,128]{1,0:T(1,128)}', space=vmem, size = 0x12000, scoped, tag = 'internal scratch']
  %s0 = inlined_call_operand.vmem [shape: f32[2,64,128], index: 0, kind: input, shape index: {}]
  %s1 = inlined_call_operand.vmem [shape: f32[1,128], index: 1, kind: input, shape index: {}]
  %s2 = inlined_call_operand.vmem [shape: f32[1,128], index: 2, kind: input, shape index: {}]
  %s3 = inlined_call_operand.vmem [shape: f32[2,64,8], index: 3, kind: output, shape index: {}]
  %s4 = sld [smem:[#allocation0]]
  $region45: #{conv_bn_relu.3} parent=0
    _
  %s6 = ssub.s32 1, %s4
  %s7 = scalar_select 0, %s6, %s4
  loop: start=0, step=1, limit=4
  $region2: #{conv_bn_relu.3} parent=0 // loop_pre_header
    _
  $region3: #{conv_bn_relu.3} parent=0 // loop_header
    %s9 = sphi 0, %s13
    %p10 = scmp.ge.s32.totalorder %s9, 4
    %s16 = sphi 0, %s28
    %s17 = sphi 0, %s24
    %s18 = sphi 0, %s16
    %s19 = sphi 0, %s17
    %s20 = sphi 0, %s18
    %s21 = sphi 0, %s19
    %s33 = sphi 0, %s35
    %s36 = sphi 0, %s33
    %s37 = sphi 0, %s36
    %s53 = sphi 0, %s37
    %s57 = sphi 0, %s57
    %s59 = sphi 0, %s57
    %s60 = sphi 0, %s59
    %s74 = sphi 0, %s60
    %s78 = sphi 0, %s78
    %s80 = sphi 0, %s78
    %s81 = sphi 0, %s80
    %s95 = sphi 0, %s81
    %s103 = sphi 0, %s105
    %s106 = sphi 0, %s103
    %s107 = sphi 0, %s106
    %s123 = sphi 0, %s107
  $region4: #{conv_bn_relu.3} parent=0 // loop_header_branch
    %12 = sbr.rel (%p10) target = $region8
  $region5: #{conv_bn_relu.3} parent=0 // loop_body
    %s14 = ssub.s32 %s9, 1
    %s15 = ssub.s32 %s9, 2
    %s22 = sadd.s32 1, %s17
    %p23 = scmp.ge.s32.totalorder %s22, 1
    %s24 = scalar_select %p23, 0, %s22
    %s25 = sadd.s32 1, %s16
    %s26 = scalar_select %p23, %s25, %s16
    %p27 = scmp.ge.s32.totalorder %s26, 2
    %s28 = scalar_select %p27, 0, %s26
    %s29 = ssub.s32 %s16, %s28
    %s30 = ssub.s32 %s17, %s24
    %s31 = sor.u32 %s29, %s30
    %p32 = scmp.eq.s32.totalorder %s31, 0
    %s34 = sadd.s32 %s33, 1
    %s35 = scalar_select %p32, %s33, %s34
    %p38 = pneg %p32
    %p39 = scmp.eq.s32.totalorder %s9, 1
    %p40 = por %p38, %p39
    %p41 = scmp.ne.s32.totalorder %s33, %s36
    %p42 = scmp.eq.s32.totalorder %s9, 0
    %p43 = por %p41, %p42
    %p44 = scmp.ne.s32.totalorder %s33, %s36
    %p45 = scmp.eq.s32.totalorder %s14, 1
    %p46 = por %p44, %p45
    %p47 = scmp.ne.s32.totalorder %s36, %s37
    %p48 = scmp.eq.s32.totalorder %s14, 0
    %p49 = por %p47, %p48
    %p50 = scmp.ne.s32.totalorder %s36, %s37
    %p51 = scmp.eq.s32.totalorder %s15, 1
    %p52 = por %p50, %p51
    %p54 = scmp.ne.s32.totalorder %s37, %s53
    %p55 = scmp.eq.s32.totalorder %s15, 0
    %p56 = por %p54, %p55
    %s58 = sadd.s32 %s57, 1
    %p61 = scmp.eq.s32.totalorder %s9, 1
    %p62 = scmp.ne.s32.totalorder %s57, %s59
    %p63 = scmp.eq.s32.totalorder %s9, 0
    %p64 = por %p62, %p63
    %p65 = scmp.ne.s32.totalorder %s57, %s59
    %p66 = scmp.eq.s32.totalorder %s14, 1
    %p67 = por %p65, %p66
    %p68 = scmp.ne.s32.totalorder %s59, %s60
    %p69 = scmp.eq.s32.totalorder %s14, 0
    %p70 = por %p68, %p69
    %p71 = scmp.ne.s32.totalorder %s59, %s60
    %p72 = scmp.eq.s32.totalorder %s15, 1
    %p73 = por %p71, %p72
    %p75 = scmp.ne.s32.totalorder %s60, %s74
    %p76 = scmp.eq.s32.totalorder %s15, 0
    %p77 = por %p75, %p76
    %s79 = sadd.s32 %s78, 1
    %p82 = scmp.eq.s32.totalorder %s9, 1
    %p83 = scmp.ne.s32.totalorder %s78, %s80
    %p84 = scmp.eq.s32.totalorder %s9, 0
    %p85 = por %p83, %p84
    %p86 = scmp.ne.s32.totalorder %s78, %s80
    %p87 = scmp.eq.s32.totalorder %s14, 1
    %p88 = por %p86, %p87
    %p89 = scmp.ne.s32.totalorder %s80, %s81
    %p90 = scmp.eq.s32.totalorder %s14, 0
    %p91 = por %p89, %p90
    %p92 = scmp.ne.s32.totalorder %s80, %s81
    %p93 = scmp.eq.s32.totalorder %s15, 1
    %p94 = por %p92, %p93
    %p96 = scmp.ne.s32.totalorder %s81, %s95
    %p97 = scmp.eq.s32.totalorder %s15, 0
    %p98 = por %p96, %p97
    %s99 = ssub.s32 %s16, %s28
    %s100 = ssub.s32 %s17, %s24
    %s101 = sor.u32 %s99, %s100
    %p102 = scmp.eq.s32.totalorder %s101, 0
    %s104 = sadd.s32 %s103, 1
    %s105 = scalar_select %p102, %s103, %s104
    %p108 = pneg %p102
    %p109 = scmp.eq.s32.totalorder %s9, 1
    %p110 = por %p108, %p109
    %p111 = scmp.ne.s32.totalorder %s103, %s106
    %p112 = scmp.eq.s32.totalorder %s9, 0
    %p113 = por %p111, %p112
    %p114 = scmp.ne.s32.totalorder %s103, %s106
    %p115 = scmp.eq.s32.totalorder %s14, 1
    %p116 = por %p114, %p115
    %p117 = scmp.ne.s32.totalorder %s106, %s107
    %p118 = scmp.eq.s32.totalorder %s14, 0
    %p119 = por %p117, %p118
    %p120 = scmp.ne.s32.totalorder %s106, %s107
    %p121 = scmp.eq.s32.totalorder %s15, 1
    %p122 = por %p120, %p121
    %p124 = scmp.ne.s32.totalorder %s107, %s123
    %p125 = scmp.eq.s32.totalorder %s15, 0
    %p126 = por %p124, %p125
    %p127 = scmp.le.s32.totalorder 1, %s9
    %p128 = scmp.lt.s32.totalorder %s9, 3
    %p129 = pnand %p127, %p128
    %p130 = pneg %p129
    // Predicated region
    $region9: #{conv_bn_relu.3} parent=5 // pred_check
      _
    $region10: #{conv_bn_relu.3} parent=5 // pred_check_branch
      %132 = sbr.rel (%p129) target = $region12
    $region11: #{conv_bn_relu.3} parent=5 // pred_region
      %s133 = ssub.s32 %s9, 1
      // Predicated region
      $region13: #{conv_bn_relu.3} parent=11 // pred_check
        %p134 = pneg %p70
      $region14: #{conv_bn_relu.3} parent=11 // pred_check_branch
        %136 = sbr.rel (%p134) target = $region16
      $region15: #{conv_bn_relu.3} parent=11 // pred_region
        _
      $region16: #{conv_bn_relu.3} parent=11 // pred_fallthru
        _
      // Predicated region
      $region17: #{conv_bn_relu.3} parent=11 // pred_check
        %p137 = pneg %p91
      $region18: #{conv_bn_relu.3} parent=11 // pred_check_branch
        %139 = sbr.rel (%p137) target = $region20
      $region19: #{conv_bn_relu.3} parent=11 // pred_region
        _
      $region20: #{conv_bn_relu.3} parent=11 // pred_fallthru
        _
    $region12: #{conv_bn_relu.3} parent=5 // pred_fallthru
      _
    %p140 = scmp.lt.s32.totalorder %s9, 2
    // Predicated region
    $region21: #{conv_bn_relu.3} parent=5 // pred_check
      %p141 = pneg %p140
    $region22: #{conv_bn_relu.3} parent=5 // pred_check_branch
      %143 = sbr.rel (%p141) target = $region24
    $region23: #{conv_bn_relu.3} parent=5 // pred_region
      // Predicated region
      $region25: #{conv_bn_relu.3} parent=23 // pred_check
        %p144 = pneg %p43
      $region26: #{conv_bn_relu.3} parent=23 // pred_check_branch
        %146 = sbr.rel (%p144) target = $region28
      $region27: #{conv_bn_relu.3} parent=23 // pred_region
        %s147 = smul.u32 8, %s17
        %p148 = scmp.lt.s32.totalorder %s16, 1
        %s149 = scalar_select %p148, %s16, 1
        %p150 = scmp.lt.s32.totalorder %s147, 7
        %s151 = scalar_select %p150, %s147, 7
        %s152 = smul.addr %s149, 8
        %s153 = sadd.s32 %s151, %s152
        %s154 = smul.addr %s153, 8
        %s155 = scalar_lea.vmem %s0, %s154
        %s156 = smul.u32 8, %s17
      $region28: #{conv_bn_relu.3} parent=23 // pred_fallthru
        _
    $region24: #{conv_bn_relu.3} parent=5 // pred_fallthru
      _
    %p157 = scmp.le.s32.totalorder 1, %s9
    %p158 = scmp.lt.s32.totalorder %s9, 3
    %p159 = pnand %p157, %p158
    %p160 = pneg %p159
    // Predicated region
    $region29: #{conv_bn_relu.3} parent=5 // pred_check
      _
    $region30: #{conv_bn_relu.3} parent=5 // pred_check_branch
      %162 = sbr.rel (%p159) target = $region32
    $region31: #{conv_bn_relu.3} parent=5 // pred_region
      %s163 = ssub.s32 %s9, 1
      %s164 = smul.u32 8, %s19
      %p165 = scmp.lt.s32.totalorder %s18, 1
      %s166 = scalar_select %p165, %s18, 1
      %p167 = scmp.lt.s32.totalorder %s164, 7
      %s168 = scalar_select %p167, %s164, 7
      %s169 = smul.addr %s166, 8
      %s170 = sadd.s32 %s168, %s169
      %s171 = smul.addr %s170, 8
      %s172 = scalar_lea.vmem %s0, %s171
      %p173 = pneg %p49
      %p174 = pneg %p46
      %p175 = pneg %p70
      %p176 = pneg %p67
      %p177 = pneg %p91
      %p178 = pneg %p88
      %p179 = pneg %p119
      %p180 = pneg %p116
      %s181 = smul.u32 8, %s19
      %p182 = scmp.lt.s32.totalorder %s18, 1
      %s183 = scalar_select %p182, %s18, 1
      %p184 = scmp.lt.s32.totalorder %s181, 7
      %s185 = scalar_select %p184, %s181, 7
      %s186 = smul.addr %s183, 8
      %s187 = sadd.s32 %s185, %s186
      %s188 = smul.addr %s187, 8
      %s189 = scalar_lea.vmem %s3, %s188
      %s190 = smul.u32 8, %s19
      %p191 = scmp.lt.s32.totalorder %s18, 1
      %s192 = scalar_select %p191, %s18, 1
      %p193 = scmp.lt.s32.totalorder %s190, 7
      %s194 = scalar_select %p193, %s190, 7
      %s195 = smul.addr %s192, 8
      %s196 = sadd.s32 %s194, %s195
      %s197 = smul.addr %s196, 8
      %s198 = scalar_lea.vmem %s0, %s197
      %s199 = smul.u32 8, %s19
      %s200 = smul.u32 8, %s19
      %p201 = scmp.lt.s32.totalorder %s18, 1
      %s202 = scalar_select %p201, %s18, 1
      %p203 = scmp.lt.s32.totalorder %s200, 7
      %s204 = scalar_select %p203, %s200, 7
      %s205 = smul.addr %s202, 8
      %s206 = sadd.s32 %s204, %s205
      %s207 = smul.addr %s206, 8
      %s208 = scalar_lea.vmem %s3, %s207
      %s209 = smul.u32 8, %s19
      %v210 = vld [vmem:[%s198] sm:$0xff]
      %v211 = vld [vmem:[%s198 + $0x8] sm:$0xff]
      %v212 = vld [vmem:[%s198 + $0x10] sm:$0xff]
      %v213 = vld [vmem:[%s198 + $0x18] sm:$0xff]
      %v214 = vld [vmem:[%s198 + $0x20] sm:$0xff]
      %v215 = vld [vmem:[%s198 + $0x28] sm:$0xff]
      %v216 = vld [vmem:[%s198 + $0x30] sm:$0xff]
      %v217 = vld [vmem:[%s198 + $0x38] sm:$0xff]
      %v218 = vld [vmem:[%s1] sm:$0x1]
      %v220 = vlaneseq
      %v221 = vshrl.u32 %v220, 7
      %v222 = vsub.s32 0, %v221
      %v223 = vrot.slane %v218, %v222
      %v225 = vmul.f32 %v210, %v223
      %v226 = vmul.f32 %v211, %v223
      %v227 = vmul.f32 %v212, %v223
      %v228 = vmul.f32 %v213, %v223
      %v229 = vmul.f32 %v214, %v223
      %v230 = vmul.f32 %v215, %v223
      %v231 = vmul.f32 %v216, %v223
      %v232 = vmul.f32 %v217, %v223
      %v233 = vld [vmem:[%s2] sm:$0x1]
      %v235 = vlaneseq
      %v236 = vshrl.u32 %v235, 7
      %v237 = vsub.s32 0, %v236
      %v238 = vrot.slane %v233, %v237
      %v240 = vadd.f32 %v225, %v238
      %v241 = vadd.f32 %v226, %v238
      %v242 = vadd.f32 %v227, %v238
      %v243 = vadd.f32 %v228, %v238
      %v244 = vadd.f32 %v229, %v238
      %v245 = vadd.f32 %v230, %v238
      %v246 = vadd.f32 %v231, %v238
      %v247 = vadd.f32 %v232, %v238
      %v248 = vmax.f32 %v240, 0.0
      %v249 = vmax.f32 %v241, 0.0
      %v250 = vmax.f32 %v242, 0.0
      %v251 = vmax.f32 %v243, 0.0
      %v252 = vmax.f32 %v244, 0.0
      %v253 = vmax.f32 %v245, 0.0
      %v254 = vmax.f32 %v246, 0.0
      %v255 = vmax.f32 %v247, 0.0
      %vm256 = vcmask 64512
      %257 = vst.msk [vmem:[%s208] sm:$0xff] %vm256, %v248
      %258 = vst.msk [vmem:[%s208 + $0x8] sm:$0xff] %vm256, %v249
      %259 = vst.msk [vmem:[%s208 + $0x10] sm:$0xff] %vm256, %v250
      %260 = vst.msk [vmem:[%s208 + $0x18] sm:$0xff] %vm256, %v251
      %261 = vst.msk [vmem:[%s208 + $0x20] sm:$0xff] %vm256, %v252
      %262 = vst.msk [vmem:[%s208 + $0x28] sm:$0xff] %vm256, %v253
      %263 = vst.msk [vmem:[%s208 + $0x30] sm:$0xff] %vm256, %v254
      %264 = vst.msk [vmem:[%s208 + $0x38] sm:$0xff] %vm256, %v255
      %s265 = smul.u32 8, %s19
      %p266 = scmp.lt.s32.totalorder %s18, 1
      %s267 = scalar_select %p266, %s18, 1
      %p268 = scmp.lt.s32.totalorder %s265, 7
      %s269 = scalar_select %p268, %s265, 7
      %s270 = smul.addr %s267, 8
      %s271 = sadd.s32 %s269, %s270
      %s272 = smul.addr %s271, 8
      %s273 = scalar_lea.vmem %s3, %s272
      // Predicated region
      $region33: #{conv_bn_relu.3} parent=31 // pred_check
        %p274 = pneg %p116
      $region34: #{conv_bn_relu.3} parent=31 // pred_check_branch
        %276 = sbr.rel (%p274) target = $region36
      $region35: #{conv_bn_relu.3} parent=31 // pred_region
        %s277 = smul.u32 8, %s19
      $region36: #{conv_bn_relu.3} parent=31 // pred_fallthru
        _
    $region32: #{conv_bn_relu.3} parent=5 // pred_fallthru
      _
    %p278 = scmp.le.s32.totalorder 2, %s9
    // Predicated region
    $region37: #{conv_bn_relu.3} parent=5 // pred_check
      %p279 = pneg %p278
    $region38: #{conv_bn_relu.3} parent=5 // pred_check_branch
      %281 = sbr.rel (%p279) target = $region40
    $region39: #{conv_bn_relu.3} parent=5 // pred_region
      %s282 = ssub.s32 %s9, 2
      // Predicated region
      $region41: #{conv_bn_relu.3} parent=39 // pred_check
        %p283 = pneg %p122
      $region42: #{conv_bn_relu.3} parent=39 // pred_check_branch
        %285 = sbr.rel (%p283) target = $region44
      $region43: #{conv_bn_relu.3} parent=39 // pred_region
        %s286 = smul.u32 8, %s21
        %p287 = scmp.lt.s32.totalorder %s20, 1
        %s288 = scalar_select %p287, %s20, 1
        %p289 = scmp.lt.s32.totalorder %s286, 7
        %s290 = scalar_select %p289, %s286, 7
        %s291 = smul.addr %s288, 8
        %s292 = sadd.s32 %s290, %s291
        %s293 = smul.addr %s292, 8
        %s294 = scalar_lea.vmem %s3, %s293
      $region44: #{conv_bn_relu.3} parent=39 // pred_fallthru
        _
    $region40: #{conv_bn_relu.3} parent=5 // pred_fallthru
      _
  $region6: #{conv_bn_relu.3} parent=0 // loop_footer
    %s13 = sadd.s32 1, %s9
  $region7: #{conv_bn_relu.3} parent=0 // loop_footer_branch
    %8 = sbr.rel target = $region3
  $region8: #{conv_bn_relu.3} parent=0 // loop_exit
    _

// kernel: conv_bn_relu.2
$region0: #{conv_bn_relu.2}
  #allocation0 [shape = 'u32[]', space=smem, size = 0x4, offset = 0x4, fixed_abs, tag = 'smem constant byte address 0x4 - core index']
  #allocation1 [shape = 'u32[144,128]{1,0:T(1,128)}', space=vmem, size = 0x12000, scoped, tag = 'internal scratch']
  %s0 = inlined_call_operand.vmem [shape: bf16[2,64,36], index: 0, kind: input, shape index: {}]
  %s1 = inlined_call_operand.vmem [shape: bf16[36,128], index: 1, kind: input, shape index: {}]
  %s2 = inlined_call_operand.vmem [shape: f32[2,64,128], index: 2, kind: output, shape index: {0}]
  %s3 = inlined_call_operand.vmem [shape: f32[2,2,128], index: 3, kind: output, shape index: {1}]
  %4 = xla_tuple %s2, %s3
  %s5 = sld [smem:[#allocation0]]
  $region49: #{conv_bn_relu.2} parent=0
    _
  %s7 = ssub.s32 1, %s5
  %s8 = scalar_select 0, %s7, %s5
  loop: start=0, step=1, limit=4
  $region2: #{conv_bn_relu.2} parent=0 // loop_pre_header
    _
  $region3: #{conv_bn_relu.2} parent=0 // loop_header
    %s10 = sphi 0, %s14
    %p11 = scmp.ge.s32.totalorder %s10, 4
    %s17 = sphi 0, %s29
    %s18 = sphi 0, %s25
    %s19 = sphi 0, %s17
    %s20 = sphi 0, %s18
    %s21 = sphi 0, %s19
    %s22 = sphi 0, %s20
    %s34 = sphi 0, %s36
    %s37 = sphi 0, %s34
    %s38 = sphi 0, %s37
    %s54 = sphi 0, %s38
    %s58 = sphi 0, %s58
    %s60 = sphi 0, %s58
    %s61 = sphi 0, %s60
    %s75 = sphi 0, %s61
    %s83 = sphi 0, %s85
    %s86 = sphi 0, %s83
    %s87 = sphi 0, %s86
    %s103 = sphi 0, %s87
    %s111 = sphi 0, %s113
    %s114 = sphi 0, %s111
    %s115 = sphi 0, %s114
    %s131 = sphi 0, %s115
  $region4: #{conv_bn_relu.2} parent=0 // loop_header_branch
    %13 = sbr.rel (%p11) target = $region8
  $region5: #{conv_bn_relu.2} parent=0 // loop_body
    %s15 = ssub.s32 %s10, 1
    %s16 = ssub.s32 %s10, 2
    %s23 = sadd.s32 1, %s18
    %p24 = scmp.ge.s32.totalorder %s23, 1
    %s25 = scalar_select %p24, 0, %s23
    %s26 = sadd.s32 1, %s17
    %s27 = scalar_select %p24, %s26, %s17
    %p28 = scmp.ge.s32.totalorder %s27, 2
    %s29 = scalar_select %p28, 0, %s27
    %s30 = ssub.s32 %s17, %s29
    %s31 = ssub.s32 %s18, %s25
    %s32 = sor.u32 %s30, %s31
    %p33 = scmp.eq.s32.totalorder %s32, 0
    %s35 = sadd.s32 %s34, 1
    %s36 = scalar_select %p33, %s34, %s35
    %p39 = pneg %p33
    %p40 = scmp.eq.s32.totalorder %s10, 1
    %p41 = por %p39, %p40
    %p42 = scmp.ne.s32.totalorder %s34, %s37
    %p43 = scmp.eq.s32.totalorder %s10, 0
    %p44 = por %p42, %p43
    %p45 = scmp.ne.s32.totalorder %s34, %s37
    %p46 = scmp.eq.s32.totalorder %s15, 1
    %p47 = por %p45, %p46
    %p48 = scmp.ne.s32.totalorder %s37, %s38
    %p49 = scmp.eq.s32.totalorder %s15, 0
    %p50 = por %p48, %p49
    %p51 = scmp.ne.s32.totalorder %s37, %s38
    %p52 = scmp.eq.s32.totalorder %s16, 1
    %p53 = por %p51, %p52
    %p55 = scmp.ne.s32.totalorder %s38, %s54
    %p56 = scmp.eq.s32.totalorder %s16, 0
    %p57 = por %p55, %p56
    %s59 = sadd.s32 %s58, 1
    %p62 = scmp.eq.s32.totalorder %s10, 1
    %p63 = scmp.ne.s32.totalorder %s58, %s60
    %p64 = scmp.eq.s32.totalorder %s10, 0
    %p65 = por %p63, %p64
    %p66 = scmp.ne.s32.totalorder %s58, %s60
    %p67 = scmp.eq.s32.totalorder %s15, 1
    %p68 = por %p66, %p67
    %p69 = scmp.ne.s32.totalorder %s60, %s61
    %p70 = scmp.eq.s32.totalorder %s15, 0
    %p71 = por %p69, %p70
    %p72 = scmp.ne.s32.totalorder %s60, %s61
    %p73 = scmp.eq.s32.totalorder %s16, 1
    %p74 = por %p72, %p73
    %p76 = scmp.ne.s32.totalorder %s61, %s75
    %p77 = scmp.eq.s32.totalorder %s16, 0
    %p78 = por %p76, %p77
    %s79 = ssub.s32 %s17, %s29
    %s80 = ssub.s32 %s18, %s25
    %s81 = sor.u32 %s79, %s80
    %p82 = scmp.eq.s32.totalorder %s81, 0
    %s84 = sadd.s32 %s83, 1
    %s85 = scalar_select %p82, %s83, %s84
    %p88 = pneg %p82
    %p89 = scmp.eq.s32.totalorder %s10, 1
    %p90 = por %p88, %p89
    %p91 = scmp.ne.s32.totalorder %s83, %s86
    %p92 = scmp.eq.s32.totalorder %s10, 0
    %p93 = por %p91, %p92
    %p94 = scmp.ne.s32.totalorder %s83, %s86
    %p95 = scmp.eq.s32.totalorder %s15, 1
    %p96 = por %p94, %p95
    %p97 = scmp.ne.s32.totalorder %s86, %s87
    %p98 = scmp.eq.s32.totalorder %s15, 0
    %p99 = por %p97, %p98
    %p100 = scmp.ne.s32.totalorder %s86, %s87
    %p101 = scmp.eq.s32.totalorder %s16, 1
    %p102 = por %p100, %p101
    %p104 = scmp.ne.s32.totalorder %s87, %s103
    %p105 = scmp.eq.s32.totalorder %s16, 0
    %p106 = por %p104, %p105
    %s107 = sadd.s32 %s17, %s18
    %s108 = sadd.s32 %s29, %s25
    %s109 = ssub.s32 %s107, %s108
    %p110 = scmp.eq.s32.totalorder %s109, 0
    %s112 = sadd.s32 %s111, 1
    %s113 = scalar_select %p110, %s111, %s112
    %p116 = pneg %p110
    %p117 = scmp.eq.s32.totalorder %s10, 1
    %p118 = por %p116, %p117
    %p119 = scmp.ne.s32.totalorder %s111, %s114
    %p120 = scmp.eq.s32.totalorder %s10, 0
    %p121 = por %p119, %p120
    %p122 = scmp.ne.s32.totalorder %s111, %s114
    %p123 = scmp.eq.s32.totalorder %s15, 1
    %p124 = por %p122, %p123
    %p125 = scmp.ne.s32.totalorder %s114, %s115
    %p126 = scmp.eq.s32.totalorder %s15, 0
    %p127 = por %p125, %p126
    %p128 = scmp.ne.s32.totalorder %s114, %s115
    %p129 = scmp.eq.s32.totalorder %s16, 1
    %p130 = por %p128, %p129
    %p132 = scmp.ne.s32.totalorder %s115, %s131
    %p133 = scmp.eq.s32.totalorder %s16, 0
    %p134 = por %p132, %p133
    %p135 = scmp.le.s32.totalorder 1, %s10
    %p136 = scmp.lt.s32.totalorder %s10, 3
    %p137 = pnand %p135, %p136
    %p138 = pneg %p137
    // Predicated region
    $region9: #{conv_bn_relu.2} parent=5 // pred_check
      _
    $region10: #{conv_bn_relu.2} parent=5 // pred_check_branch
      %140 = sbr.rel (%p137) target = $region12
    $region11: #{conv_bn_relu.2} parent=5 // pred_region
      %s141 = ssub.s32 %s10, 1
      // Predicated region
      $region13: #{conv_bn_relu.2} parent=11 // pred_check
        %p142 = pneg %p71
      $region14: #{conv_bn_relu.2} parent=11 // pred_check_branch
        %144 = sbr.rel (%p142) target = $region16
      $region15: #{conv_bn_relu.2} parent=11 // pred_region
        _
      $region16: #{conv_bn_relu.2} parent=11 // pred_fallthru
        _
    $region12: #{conv_bn_relu.2} parent=5 // pred_fallthru
      _
    %p145 = scmp.lt.s32.totalorder %s10, 2
    // Predicated region
    $region17: #{conv_bn_relu.2} parent=5 // pred_check
      %p146 = pneg %p145
    $region18: #{conv_bn_relu.2} parent=5 // pred_check_branch
      %148 = sbr.rel (%p146) target = $region20
    $region19: #{conv_bn_relu.2} parent=5 // pred_region
      // Predicated region
      $region21: #{conv_bn_relu.2} parent=19 // pred_check
        %p149 = pneg %p44
      $region22: #{conv_bn_relu.2} parent=19 // pred_check_branch
        %151 = sbr.rel (%p149) target = $region24
      $region23: #{conv_bn_relu.2} parent=19 // pred_region
        %s152 = smul.u32 8, %s18
        %p153 = scmp.lt.s32.totalorder %s17, 1
        %s154 = scalar_select %p153, %s17, 1
        %p155 = scmp.lt.s32.totalorder %s152, 7
        %s156 = scalar_select %p155, %s152, 7
        %s157 = smul.addr %s154, 8
        %s158 = sadd.s32 %s156, %s157
        %s159 = smul.addr %s158, 4
        %s160 = scalar_lea.vmem %s0, %s159
        %s161 = smul.u32 8, %s18
      $region24: #{conv_bn_relu.2} parent=19 // pred_fallthru
        _
    $region20: #{conv_bn_relu.2} parent=5 // pred_fallthru
      _
    %p162 = scmp.le.s32.totalorder 1, %s10
    %p163 = scmp.lt.s32.totalorder %s10, 3
    %p164 = pnand %p162, %p163
    %p165 = pneg %p164
    // Predicated region
    $region25: #{conv_bn_relu.2} parent=5 // pred_check
      _
    $region26: #{conv_bn_relu.2} parent=5 // pred_check_branch
      %167 = sbr.rel (%p164) target = $region28
    $region27: #{conv_bn_relu.2} parent=5 // pred_region
      %s168 = ssub.s32 %s10, 1
      %s169 = smul.u32 8, %s20
      %p170 = scmp.lt.s32.totalorder %s19, 1
      %s171 = scalar_select %p170, %s19, 1
      %p172 = scmp.lt.s32.totalorder %s169, 7
      %s173 = scalar_select %p172, %s169, 7
      %s174 = smul.addr %s171, 8
      %s175 = sadd.s32 %s173, %s174
      %s176 = smul.addr %s175, 4
      %s177 = scalar_lea.vmem %s0, %s176
      %p178 = pneg %p50
      %p179 = pneg %p47
      %p180 = pneg %p71
      %p181 = pneg %p68
      %p182 = pneg %p99
      %p183 = pneg %p96
      %s184 = smul.u32 8, %s20
      %p185 = scmp.lt.s32.totalorder %s19, 1
      %s186 = scalar_select %p185, %s19, 1
      %p187 = scmp.lt.s32.totalorder %s184, 7
      %s188 = scalar_select %p187, %s184, 7
      %s189 = smul.addr %s186, 8
      %s190 = sadd.s32 %s188, %s189
      %s191 = smul.addr %s190, 8
      %s192 = scalar_lea.vmem %s2, %s191
      %p193 = pneg %p127
      %p194 = pneg %p124
      %s195 = sadd.s32 %s19, %s20
      %p196 = scmp.lt.s32.totalorder %s195, 1
      %s197 = scalar_select %p196, %s195, 1
      %s198 = smul.addr %s197, 2
      %s199 = scalar_lea.vmem %s3, %s198
      %s200 = smul.u32 8, %s20
      %p201 = scmp.lt.s32.totalorder %s19, 1
      %s202 = scalar_select %p201, %s19, 1
      %p203 = scmp.lt.s32.totalorder %s200, 7
      %s204 = scalar_select %p203, %s200, 7
      %s205 = smul.addr %s202, 8
      %s206 = sadd.s32 %s204, %s205
      %s207 = smul.addr %s206, 4
      %s208 = scalar_lea.vmem %s0, %s207
      %s209 = smul.u32 8, %s20
      %s210 = smul.u32 8, %s20
      %p211 = scmp.lt.s32.totalorder %s19, 1
      %s212 = scalar_select %p211, %s19, 1
      %p213 = scmp.lt.s32.totalorder %s210, 7
      %s214 = scalar_select %p213, %s210, 7
      %s215 = smul.addr %s212, 8
      %s216 = sadd.s32 %s214, %s215
      %s217 = smul.addr %s216, 8
      %s218 = scalar_lea.vmem %s2, %s217
      %s219 = smul.u32 8, %s20
      %s220 = sadd.s32 %s19, %s20
      %p221 = scmp.lt.s32.totalorder %s220, 1
      %s222 = scalar_select %p221, %s220, 1
      %s223 = smul.addr %s222, 2
      %s224 = scalar_lea.vmem %s3, %s223
      %s225 = sadd.s32 %s19, %s20
      %v227 = vld [vmem:[%s208] sm:$0xf]
      %v228 = vld [vmem:[%s208 + $0x4] sm:$0xf]
      %v229 = vld [vmem:[%s208 + $0x8] sm:$0xf]
      %v230 = vld [vmem:[%s208 + $0xc] sm:$0xf]
      %v231 = vld [vmem:[%s208 + $0x10] sm:$0xf]
      %v232 = vld [vmem:[%s208 + $0x14] sm:$0xf]
      %v233 = vld [vmem:[%s208 + $0x18] sm:$0xf]
      %v234 = vld [vmem:[%s208 + $0x1c] sm:$0xf]
      %v235 = vld [vmem:[%s1] sm:$0xf]
      %v236 = vld [vmem:[%s1 + $0x4] sm:$0xf]
      %v237 = vld [vmem:[%s1 + $0x8] sm:$0xf]
      %v238 = vld [vmem:[%s1 + $0xc] sm:$0xf]
      %v239 = vld [vmem:[%s1 + $0x10] sm:$0x3]
      %v248 = vunpack.c.l.b16 %v227
      %v249 = vunpack.c.l.b16 %v228
      %v250 = vunpack.c.l.b16 %v229
      %v251 = vunpack.c.l.b16 %v230
      %v252 = vunpack.c.l.b16 %v231
      %v253 = vunpack.c.l.b16 %v232
      %v254 = vunpack.c.l.b16 %v233
      %v255 = vunpack.c.l.b16 %v234
      %v256 = vpack.c.b16 %v249, %v248
      %v257 = vpack.c.b16 %v251, %v250
      %v258 = vpack.c.b16 %v253, %v252
      %v259 = vpack.c.b16 %v255, %v254
      %v265 = vunpack.c.l.b16 %v235
      %v266 = vunpack.c.l.b16 %v236
      %v267 = vunpack.c.l.b16 %v237
      %v268 = vunpack.c.l.b16 %v238
      %v269 = vunpack.c.l.b16 %v239
      %v270 = vpack.c.b16 %v266, %v265
      %v271 = vpack.c.b16 %v268, %v267
      %v272 = vpack.c.b16 %v269, %v269
      %vm275 = vcmask 293888
      %v277 = vsel %vm275, %v256, 0
      %v280 = vsel %vm275, %v257, 0
      %v283 = vsel %vm275, %v258, 0
      %v286 = vsel %vm275, %v259, 0
      %vm288 = vcmask 1041408
      %v290 = vsel %vm288, %v272, 0
      %292 = vmatprep.subr.bf16.mxu0 0
      %293 = vmatpush1.bf16.msra.mxu0 0
      %294 = vmatprep.subr.bf16.mxu0 0
      %295 = vmatpush1.bf16.msra.mxu0 0
      %296 = vmatprep.subr.bf16.mxu0 0
      %297 = vmatpush1.bf16.msra.mxu0 0
      %298 = vmatprep.subr.bf16.mxu0 0
      %299 = vmatpush1.bf16.msra.mxu0 0
      %300 = vmatprep.subr.bf16.mxu0 0
      %301 = vmatpush1.bf16.msra.mxu0 0
      %302 = vmatprep.subr.bf16.mxu0 0
      %303 = vmatpush1.bf16.msra.mxu0 %v290
      %304 = vmatprep.subr.bf16.mxu0 0
      %305 = vmatpush1.bf16.msra.mxu0 %v271
      %306 = vmatprep.subr.bf16.mxu0 0
      %307 = vmatpush1.bf16.msra.mxu0 %v270
      %308 = vmatprep.subr.bf16.mxu0 0
      %309 = vmatpush2.bf16.msra.mxu0 0
      %310 = vmatprep.subr.bf16.mxu0 0
      %311 = vmatpush2.bf16.msra.mxu0 0
      %312 = vmatprep.subr.bf16.mxu0 0
      %313 = vmatpush2.bf16.msra.mxu0 0
      %314 = vmatprep.subr.bf16.mxu0 0
      %315 = vmatpush2.bf16.msra.mxu0 0
      %316 = vmatprep.subr.bf16.mxu0 0
      %317 = vmatpush2.bf16.msra.mxu0 0
      %318 = vmatprep.subr.bf16.mxu0 0
      %319 = vmatpush2.bf16.msra.mxu0 0
      %320 = vmatprep.subr.bf16.mxu0 0
      %321 = vmatpush2.bf16.msra.mxu0 0
      %322 = vmatprep.subr.bf16.mxu0 0
      %323 = vmatpush2.bf16.msra.mxu0 0
      %324 = vmatprep.mubr.bf16.mxu0 0
      %325 = vmatmul.mubr.bf16.gmra.mxu0 %v277
      %v326 = vpop.f32.mrf.mxu0
      %v327 = vadd.f32 0.0, %v326
      %v328 = vpop.f32.mrf.mxu0
      %v329 = vpop.f32.mrf.mxu0
      %v330 = vadd.f32 0.0, %v329
      %v331 = vpop.f32.mrf.mxu0
      %332 = vmatprep.mubr.bf16.mxu0 0
      %333 = vmatmul.mubr.bf16.gmra.mxu0 %v280
      %v334 = vpop.f32.mrf.mxu0
      %v335 = vadd.f32 0.0, %v334
      %v336 = vpop.f32.mrf.mxu0
      %v337 = vpop.f32.mrf.mxu0
      %v338 = vadd.f32 0.0, %v337
      %v339 = vpop.f32.mrf.mxu0
      %340 = vmatprep.mubr.bf16.mxu0 0
      %341 = vmatmul.mubr.bf16.gmra.mxu0 %v283
      %v342 = vpop.f32.mrf.mxu0
      %v343 = vadd.f32 0.0, %v342
      %v344 = vpop.f32.mrf.mxu0
      %v345 = vpop.f32.mrf.mxu0
      %v346 = vadd.f32 0.0, %v345
      %v347 = vpop.f32.mrf.mxu0
      %348 = vmatprep.mubr.bf16.mxu0 0
      %349 = vmatmul.mubr.bf16.gmra.mxu0 %v286
      %v350 = vpop.f32.mrf.mxu0
      %v351 = vadd.f32 0.0, %v350
      %v352 = vpop.f32.mrf.mxu0
      %v353 = vpop.f32.mrf.mxu0
      %v354 = vadd.f32 0.0, %v353
      %v355 = vpop.f32.mrf.mxu0
      %356 = vdwg.mxu0
      %357 = vst [vmem:[%s218] sm:$0xff] %v327
      %358 = vst [vmem:[%s218 + $0x8] sm:$0xff] %v330
      %359 = vst [vmem:[%s218 + $0x10] sm:$0xff] %v335
      %360 = vst [vmem:[%s218 + $0x18] sm:$0xff] %v338
      %361 = vst [vmem:[%s218 + $0x20] sm:$0xff] %v343
      %362 = vst [vmem:[%s218 + $0x28] sm:$0xff] %v346
      %363 = vst [vmem:[%s218 + $0x30] sm:$0xff] %v351
      %364 = vst [vmem:[%s218 + $0x38] sm:$0xff] %v354
      %v365 = vadd.f32 %v327, %v330
      %v366 = vadd.f32 %v365, %v335
      %v367 = vadd.f32 %v366, %v338
      %v368 = vadd.f32 %v367, %v343
      %v369 = vadd.f32 %v368, %v346
      %v370 = vadd.f32 %v369, %v351
      %v371 = vadd.f32 %v370, %v354
      %v372 = vrot.slane %v371, 4
      %v373 = vadd.f32 %v371, %v372
      %v374 = vrot.slane %v373, 2
      %v375 = vadd.f32 %v373, %v374
      %v376 = vrot.slane %v375, 1
      %v377 = vadd.f32 %v375, %v376
      %378 = vst [vmem:[%s224] sm:$0x1] %v377
      %v379 = vmul.f32 %v327, %v327
      %v380 = vmul.f32 %v330, %v330
      %v381 = vmul.f32 %v335, %v335
      %v382 = vmul.f32 %v338, %v338
      %v383 = vmul.f32 %v343, %v343
      %v384 = vmul.f32 %v346, %v346
      %v385 = vmul.f32 %v351, %v351
      %v386 = vmul.f32 %v354, %v354
      %v387 = vadd.f32 %v379, %v380
      %v388 = vadd.f32 %v387, %v381
      %v389 = vadd.f32 %v388, %v382
      %v390 = vadd.f32 %v389, %v383
      %v391 = vadd.f32 %v390, %v384
      %v392 = vadd.f32 %v391, %v385
      %v393 = vadd.f32 %v392, %v386
      %v394 = vrot.slane %v393, 4
      %v395 = vadd.f32 %v393, %v394
      %v396 = vrot.slane %v395, 2
      %v397 = vadd.f32 %v395, %v396
      %v398 = vrot.slane %v397, 1
      %v399 = vadd.f32 %v397, %v398
      %400 = vst [vmem:[%s224 + $0x1] sm:$0x1] %v399
      %s401 = smul.u32 8, %s20
      %p402 = scmp.lt.s32.totalorder %s19, 1
      %s403 = scalar_select %p402, %s19, 1
      %p404 = scmp.lt.s32.totalorder %s401, 7
      %s405 = scalar_select %p404, %s401, 7
      %s406 = smul.addr %s403, 8
      %s407 = sadd.s32 %s405, %s406
      %s408 = smul.addr %s407, 8
      %s409 = scalar_lea.vmem %s2, %s408
      %s410 = sadd.s32 %s19, %s20
      %p411 = scmp.lt.s32.totalorder %s410, 1
      %s412 = scalar_select %p411, %s410, 1
      %s413 = smul.addr %s412, 2
      %s414 = scalar_lea.vmem %s3, %s413
      // Predicated region
      $region29: #{conv_bn_relu.2} parent=27 // pred_check
        %p415 = pneg %p96
      $region30: #{conv_bn_relu.2} parent=27 // pred_check_branch
        %417 = sbr.rel (%p415) target = $region32
      $region31: #{conv_bn_relu.2} parent=27 // pred_region
        %s418 = smul.u32 8, %s20
      $region32: #{conv_bn_relu.2} parent=27 // pred_fallthru
        _
      // Predicated region
      $region33: #{conv_bn_relu.2} parent=27 // pred_check
        %p419 = pneg %p124
      $region34: #{conv_bn_relu.2} parent=27 // pred_check_branch
        %421 = sbr.rel (%p419) target = $region36
      $region35: #{conv_bn_relu.2} parent=27 // pred_region
        %s422 = sadd.s32 %s19, %s20
      $region36: #{conv_bn_relu.2} parent=27 // pred_fallthru
        _
    $region28: #{conv_bn_relu.2} parent=5 // pred_fallthru
      _
    %p423 = scmp.le.s32.totalorder 2, %s10
    // Predicated region
    $region37: #{conv_bn_relu.2} parent=5 // pred_check
      %p424 = pneg %p423
    $region38: #{conv_bn_relu.2} parent=5 // pred_check_branch
      %426 = sbr.rel (%p424) target = $region40
    $region39: #{conv_bn_relu.2} parent=5 // pred_region
      %s427 = ssub.s32 %s10, 2
      // Predicated region
      $region41: #{conv_bn_relu.2} parent=39 // pred_check
        %p428 = pneg %p102
      $region42: #{conv_bn_relu.2} parent=39 // pred_check_branch
        %430 = sbr.rel (%p428) target = $region44
      $region43: #{conv_bn_relu.2} parent=39 // pred_region
        %s431 = smul.u32 8, %s22
        %p432 = scmp.lt.s32.totalorder %s21, 1
        %s433 = scalar_select %p432, %s21, 1
        %p434 = scmp.lt.s32.totalorder %s431, 7
        %s435 = scalar_select %p434, %s431, 7
        %s436 = smul.addr %s433, 8
        %s437 = sadd.s32 %s435, %s436
        %s438 = smul.addr %s437, 8
        %s439 = scalar_lea.vmem %s2, %s438
      $region44: #{conv_bn_relu.2} parent=39 // pred_fallthru
        _
      // Predicated region
      $region45: #{conv_bn_relu.2} parent=39 // pred_check
        %p440 = pneg %p130
      $region46: #{conv_bn_relu.2} parent=39 // pred_check_branch
        %442 = sbr.rel (%p440) target = $region48
      $region47: #{conv_bn_relu.2} parent=39 // pred_region
        %s443 = sadd.s32 %s21, %s22
        %p444 = scmp.lt.s32.totalorder %s443, 1
        %s445 = scalar_select %p444, %s443, 1
        %s446 = smul.addr %s445, 2
        %s447 = scalar_lea.vmem %s3, %s446
      $region48: #{conv_bn_relu.2} parent=39 // pred_fallthru
        _
    $region40: #{conv_bn_relu.2} parent=5 // pred_fallthru
      _
  $region6: #{conv_bn_relu.2} parent=0 // loop_footer
    %s14 = sadd.s32 1, %s10
  $region7: #{conv_bn_relu.2} parent=0 // loop_footer_branch
    %9 = sbr.rel target = $region3
  $region8: #{conv_bn_relu.2} parent=0 // loop_exit
    _

</llo_original>
